<compile_context>
chip_gen: v7x
topology: tpu7x:2x2x1
jax: 0.10.0
libtpu: 0.0.40
codegen_flags: <defaults>
</compile_context>

<pallas_src>
import functools

import jax
import jax.numpy as jnp
from jax import lax
from jax.experimental import pallas as pl
from jax.experimental.pallas import tpu as pltpu


# --------------------------- tiling / vmem helpers ---------------------------
def _pick_row_tile(a_rows):
    """Token-row tile (sublane aligned). Big tiles amortize grid-step overhead and
    fill the 256-wide MXU on v6e/v7x; capped so per-expert padding (< TM rows per
    expert) stays small relative to the real assignment count."""
    for tm in (512, 256, 128, 64, 32, 16, 8):
        if a_rows >= 8 * tm:
            return tm
    return 8


def _pick_hidden_tile(h, d, chunk_budget_bytes=24 << 20):
    """Hidden-dim chunk so double-buffered bf16 W1/W2 chunks fit VMEM (v7x: 64 MiB)."""
    if h < 128 or h % 128 != 0:
        return h  # small / odd H: single chunk (block == full array dim is allowed)
    candidates = [t for t in range(128, h + 1, 128) if h % t == 0]
    fits = [t for t in candidates if 8 * d * t <= chunk_budget_bytes]  # 2 bufs x (W1+W2) bf16
    return max(fits) if fits else 128


def _pick_divisor_tile(n, cap=256):
    """Largest tile <= cap dividing n that is sublane aligned (or the full extent)."""
    for tm in range(min(cap, n), 0, -1):
        if n % tm == 0 and (tm % 8 == 0 or tm == n):
            return tm
    return n


def _vmem_limit_bytes():
    """~75% of physical VMEM (~48 MiB on v7x, ~96 MiB on v5e/v6e); safe fallback."""
    cap = 64 << 20
    try:
        cap = int(pltpu.get_tpu_info().vmem_capacity_bytes)
    except Exception:
        pass
    return int(min(cap * 3 // 4, 112 << 20))


# ----------------------------- router kernel --------------------------------
def _router_kernel(x_ref, w_ref, b_ref, o_ref, *, inv_temp):
    # probs = softmax((x @ W_r + b_r) / T) fused in one kernel (no f32 logits
    # round-trip through HBM between the matmul and the gating glue).
    logits = (
        jnp.dot(x_ref[...], w_ref[...], preferred_element_type=jnp.float32)
        + b_ref[...]
    ) * inv_temp
    m = jnp.max(logits, axis=-1, keepdims=True)
    e = jnp.exp(logits - m)
    o_ref[...] = (e / jnp.sum(e, axis=-1, keepdims=True)).astype(o_ref.dtype)


def router_probs(x2d, w_r, b_r, *, temperature):
    n, d = x2d.shape
    e = w_r.shape[1]
    tm = _pick_divisor_tile(n)
    kern = functools.partial(_router_kernel, inv_temp=1.0 / float(temperature))
    return pl.pallas_call(
        kern,
        out_shape=jax.ShapeDtypeStruct((n, e), jnp.float32),
        grid_spec=pltpu.PrefetchScalarGridSpec(
            num_scalar_prefetch=0,
            grid=(n // tm,),
            in_specs=[
                pl.BlockSpec((tm, d), lambda i: (i, 0)),
                pl.BlockSpec((d, e), lambda i: (0, 0)),
                pl.BlockSpec((1, e), lambda i: (0, 0)),
            ],
            out_specs=pl.BlockSpec((tm, e), lambda i: (i, 0)),
        ),
        compiler_params=pltpu.CompilerParams(
            dimension_semantics=("parallel",),
        ),
    )(x2d, w_r, b_r)


# --------------------------- grouped expert kernel ---------------------------
def _expert_ffn_kernel(eid_ref, valid_ref,            # SMEM scalar-prefetch (1-D int32)
                       x_ref,                          # (TM, D) bf16, expert-sorted rows
                       w1_ref, b1_ref, w2_ref, b2_ref,  # (D,TH) bf16, (1,TH) f32, (TH,D) bf16, (1,D) f32
                       o_ref):                         # (TM, D) f32, resident across h
    i = pl.program_id(0)          # row tile
    h = pl.program_id(1)          # hidden chunk
    valid = valid_ref[i] != 0
    first_chunk = h == 0

    # Start the in-place accumulation from the second-layer bias.
    @pl.when(jnp.logical_and(first_chunk, valid))
    def _():
        o_ref[...] = jnp.zeros_like(o_ref) + b2_ref[...]

    # Fully-padding tiles: store zeros so the combine never reads garbage.
    @pl.when(jnp.logical_and(first_chunk, jnp.logical_not(valid)))
    def _():
        o_ref[...] = jnp.zeros_like(o_ref)

    @pl.when(valid)
    def _():
        hid = (
            jnp.dot(x_ref[...], w1_ref[...], preferred_element_type=jnp.float32)
            + b1_ref[...]
        )
        hid = jnp.maximum(hid, 0.0)
        o_ref[...] += jnp.dot(hid.astype(w2_ref.dtype), w2_ref[...],
                              preferred_element_type=jnp.float32)


# ------------------------------- MoE forward ---------------------------------
def moe_forward(x, params, *, k, temperature):
    """x: (B, L, D) float32 -> (B, L, D) float32."""
    B, L, D = x.shape
    N = B * L
    x2d = x.reshape(N, D)

    rw1, rb1, rw2, rb2 = params["rw1"], params["rb1"], params["rw2"], params["rb2"]
    sw1, sb1, sw2, sb2 = params["sw1"], params["sb1"], params["sw2"], params["sb2"]
    E, _, H = rw1.shape
    S = sw1.shape[0]
    E_total = E + S  # routed experts first, shared experts last (always non-empty)

    # ---- routing: Pallas router (fused bias / temperature / softmax) + top-k ----
    probs = router_probs(x2d, params["router_w"], params["router_b"],
                         temperature=temperature)                      # (N, E)
    top_p, top_i = lax.top_k(probs, k)                                 # (N, k)

    # ---- build token->expert assignment list: routed (N*k) then shared (N*S) ----
    tok = jnp.concatenate([
        jnp.repeat(jnp.arange(N, dtype=jnp.int32), k),
        jnp.tile(jnp.arange(N, dtype=jnp.int32), S),
    ])
    eid = jnp.concatenate([
        top_i.reshape(N * k).astype(jnp.int32),
        E + jnp.repeat(jnp.arange(S, dtype=jnp.int32), N),
    ])
    gate = jnp.concatenate([
        top_p.reshape(N * k).astype(jnp.float32),
        jnp.ones((N * S,), jnp.float32),
    ])
    A = N * (k + S)

    TM = _pick_row_tile(A)
    TH = _pick_hidden_tile(H, D)
    num_h = H // TH

    # ---- sort assignments by expert -> expert-contiguous, tile-padded rows ----
    order = jnp.argsort(eid)
    tok_s, eid_s, gate_s = tok[order], eid[order], gate[order]

    counts = jnp.bincount(eid, length=E_total).astype(jnp.int32)        # per-expert rows
    padded_counts = ((counts + TM - 1) // TM) * TM
    off = jnp.concatenate(
        [jnp.zeros((1,), jnp.int32), jnp.cumsum(counts)[:-1].astype(jnp.int32)])
    poff = jnp.concatenate(
        [jnp.zeros((1,), jnp.int32), jnp.cumsum(padded_counts)[:-1].astype(jnp.int32)])

    # destination slot of each sorted assignment in the padded layout
    dest = poff[eid_s] + (jnp.arange(A, dtype=jnp.int32) - off[eid_s])

    M_pad = (pl.cdiv(A, TM) + E_total) * TM       # static bound on padded row count
    num_tiles = M_pad // TM

    tok_p = jnp.zeros((M_pad,), jnp.int32).at[dest].set(tok_s)
    gate_p = jnp.zeros((M_pad,), jnp.float32).at[dest].set(gate_s)      # padding rows: gate 0
    x_rows = x2d[tok_p].astype(jnp.bfloat16)                             # (M_pad, D)

    # ---- per-tile expert id / validity (flat 1-D int32 -> SMEM scalar prefetch) ----
    padded_cum = jnp.cumsum(padded_counts).astype(jnp.int32)
    tile_start = jnp.arange(num_tiles, dtype=jnp.int32) * TM
    tile_valid = (tile_start < padded_cum[-1]).astype(jnp.int32)
    # Shared experts sit last and always have tokens, so clamping trailing padding
    # tiles to E_total-1 makes them reuse the previous tile's weight block -> the
    # weight DMA for padding tiles is skipped entirely.
    tile_eid = jnp.minimum(
        jnp.searchsorted(padded_cum, tile_start, side="right"), E_total - 1
    ).astype(jnp.int32)

    # ---- expert weight stacks (routed first, shared last) ----
    # For a real model these concatenations / casts happen once at load time.
    w1 = jnp.concatenate([rw1, sw1], axis=0).astype(jnp.bfloat16)        # (E_total, D, H)
    b1 = jnp.concatenate([rb1, sb1], axis=0).astype(jnp.float32)         # (E_total, 1, H)
    w2 = jnp.concatenate([rw2, sw2], axis=0).astype(jnp.bfloat16)        # (E_total, H, D)
    b2 = jnp.concatenate([rb2, sb2], axis=0).astype(jnp.float32)         # (E_total, 1, D)

    y_rows = pl.pallas_call(
        _expert_ffn_kernel,
        out_shape=jax.ShapeDtypeStruct((M_pad, D), jnp.float32),
        grid_spec=pltpu.PrefetchScalarGridSpec(
            num_scalar_prefetch=2,
            grid=(num_tiles, num_h),
            in_specs=[
                pl.BlockSpec((TM, D), lambda i, h, te, tv: (i, 0)),                   # sorted rows
                pl.BlockSpec((pl.Squeezed(), D, TH), lambda i, h, te, tv: (te[i], 0, h)),  # W1 chunk
                pl.BlockSpec((pl.Squeezed(), 1, TH), lambda i, h, te, tv: (te[i], 0, h)),  # b1 chunk
                pl.BlockSpec((pl.Squeezed(), TH, D), lambda i, h, te, tv: (te[i], h, 0)),  # W2 chunk
                pl.BlockSpec((pl.Squeezed(), 1, D), lambda i, h, te, tv: (te[i], 0, 0)),   # b2
            ],
            out_specs=pl.BlockSpec((TM, D), lambda i, h, te, tv: (i, 0)),
        ),
        compiler_params=pltpu.CompilerParams(
            dimension_semantics=("parallel", "arbitrary"),
            vmem_limit_bytes=_vmem_limit_bytes(),
        ),
    )(tile_eid, tile_valid, x_rows, w1, b1, w2, b2)

    # ---- combine: gate + scatter-add back to tokens (padding rows carry gate 0) ----
    out2d = jnp.zeros((N, D), jnp.float32).at[tok_p].add(gate_p[:, None] * y_rows)
    return out2d.reshape(B, L, D).astype(x.dtype)


# ------------------------------ reference (JAX) ------------------------------
def moe_reference(x, params, *, k, temperature):
    B, L, D = x.shape
    N = B * L
    x2d = x.reshape(N, D).astype(jnp.float32)

    def ffn(xt, w1, b1, w2, b2):
        return jnp.maximum(xt @ w1 + b1, 0.0) @ w2 + b2

    out = jnp.zeros((N, D), jnp.float32)
    for s in range(params["sw1"].shape[0]):
        out = out + ffn(x2d, params["sw1"][s], params["sb1"][s],
                        params["sw2"][s], params["sb2"][s])

    logits = x2d @ params["router_w"] + params["router_b"]
    probs = jax.nn.softmax(logits / temperature, axis=-1)
    top_p, top_i = lax.top_k(probs, k)
    E = params["rw1"].shape[0]
    gates = jnp.zeros((N, E), jnp.float32)
    gates = gates.at[jnp.arange(N)[:, None], top_i].set(top_p)

    for e in range(E):
        y = ffn(x2d, params["rw1"][e], params["rb1"][e],
                params["rw2"][e], params["rb2"][e])
        out = out + gates[:, e:e + 1] * y
    return out.reshape(B, L, D)


# ---------------------------------- main -------------------------------------
if __name__ == "__main__":
    B, L, D = 2, 8, 32
    routed_experts, shared_experts, active_experts = 6, 1, 3
    hidden_expansion = 1
    temperature = 1.0
    H = D * hidden_expansion

    key = jax.random.PRNGKey(0)
    keys = jax.random.split(key, 12)
    scale = 0.05

    params = {
        "router_w": scale * jax.random.normal(keys[0], (D, routed_experts), jnp.float32),
        "router_b": scale * jax.random.normal(keys[1], (1, routed_experts), jnp.float32),
        "sw1": scale * jax.random.normal(keys[2], (shared_experts, D, H), jnp.float32),
        "sb1": scale * jax.random.normal(keys[3], (shared_experts, 1, H), jnp.float32),
        "sw2": scale * jax.random.normal(keys[4], (shared_experts, H, D), jnp.float32),
        "sb2": scale * jax.random.normal(keys[5], (shared_experts, 1, D), jnp.float32),
        "rw1": scale * jax.random.normal(keys[6], (routed_experts, D, H), jnp.float32),
        "rb1": scale * jax.random.normal(keys[7], (routed_experts, 1, H), jnp.float32),
        "rw2": scale * jax.random.normal(keys[8], (routed_experts, H, D), jnp.float32),
        "rb2": scale * jax.random.normal(keys[9], (routed_experts, 1, D), jnp.float32),
    }

    x = jax.random.normal(keys[10], (B, L, D), jnp.float32)

    fwd = functools.partial(moe_forward, k=active_experts, temperature=temperature)
    out = jax.block_until_ready(fwd(x, params))

    ref = moe_reference(x, params, k=active_experts, temperature=temperature)
    assert out.shape == (B, L, D)
    # bf16 expert-matmul operands with f32 accumulation -> slightly loose tolerance
    assert jnp.allclose(out, ref, atol=2e-2, rtol=2e-2), "mismatch vs reference"

    print("KERNEL_OK")
</pallas_src>

<mosaic_0001>
module attributes {stable_mosaic.version = 11 : i64} {
  func.func @_router_kernel(%arg0: i32, %arg1: memref<16x32xf32, #tpu.memory_space<vmem>>, %arg2: memref<32x6xf32, #tpu.memory_space<vmem>>, %arg3: memref<1x6xf32, #tpu.memory_space<vmem>>, %arg4: memref<16x6xf32, #tpu.memory_space<vmem>>) attributes {dimension_semantics = [#tpu.dimension_semantics<parallel>], iteration_bounds = array<i64: 1>, scalar_prefetch = 0 : i64, scratch_operands = 0 : i64, tpu.core_type = #tpu.core_type<tc>, window_params = [{transform_indices = @transform_0, window_bounds = array<i64: 16, 32>}, {pipeline_mode = #tpu.pipeline_mode<synchronous>, transform_indices = @transform_1, window_bounds = array<i64: 32, 6>}, {pipeline_mode = #tpu.pipeline_mode<synchronous>, transform_indices = @transform_2, window_bounds = array<i64: 1, 6>}, {transform_indices = @transform_3, window_bounds = array<i64: 16, 6>}]} {
    %c0 = arith.constant 0 : index
    %c0_0 = arith.constant 0 : index
    %0 = vector.load %arg1[%c0, %c0_0] : memref<16x32xf32, #tpu.memory_space<vmem>>, vector<16x32xf32>
    %c0_1 = arith.constant 0 : index
    %c0_2 = arith.constant 0 : index
    %1 = vector.load %arg2[%c0_1, %c0_2] : memref<32x6xf32, #tpu.memory_space<vmem>>, vector<32x6xf32>
    %cst = arith.constant dense<0.000000e+00> : vector<16x6xf32>
    %2 = tpu.matmul %0, %1, %cst {dimension_numbers = #tpu.dot_dimension_numbers<[1], [0], [0], [1], [0, 0, 1, 1], [], []>} : vector<16x32xf32>, vector<32x6xf32>, vector<16x6xf32> -> vector<16x6xf32>
    %c0_3 = arith.constant 0 : index
    %c0_4 = arith.constant 0 : index
    %3 = vector.load %arg3[%c0_3, %c0_4] : memref<1x6xf32, #tpu.memory_space<vmem>>, vector<1x6xf32>
    %4 = vector.broadcast %3 : vector<1x6xf32> to vector<16x6xf32>
    %5 = arith.addf %2, %4 : vector<16x6xf32>
    %cst_5 = arith.constant 1.000000e+00 : f32
    %6 = vector.broadcast %cst_5 : f32 to vector<16x6xf32>
    %7 = arith.mulf %5, %6 : vector<16x6xf32>
    %cst_6 = arith.constant dense<0xFF800000> : vector<16xf32>
    %8 = vector.multi_reduction <maximumf>, %7, %cst_6 [1] : vector<16x6xf32> to vector<16xf32>
    %9 = vector.shape_cast %8 : vector<16xf32> to vector<16x1xf32>
    %10 = vector.broadcast %9 : vector<16x1xf32> to vector<16x6xf32>
    %11 = arith.subf %7, %10 : vector<16x6xf32>
    %12 = math.exp %11 : vector<16x6xf32>
    %cst_7 = arith.constant dense<0.000000e+00> : vector<16xf32>
    %13 = vector.multi_reduction <add>, %12, %cst_7 [1] : vector<16x6xf32> to vector<16xf32>
    %14 = vector.shape_cast %13 : vector<16xf32> to vector<16x1xf32>
    %15 = vector.broadcast %14 : vector<16x1xf32> to vector<16x6xf32>
    %16 = arith.divf %12, %15 : vector<16x6xf32>
    %c0_8 = arith.constant 0 : index
    %c0_9 = arith.constant 0 : index
    %17 = vector.load %arg4[%c0_8, %c0_9] : memref<16x6xf32, #tpu.memory_space<vmem>>, vector<16x6xf32>
    tpu.vector_store %arg4[%c0_8, %c0_9], %16 {strides = array<i32>} : memref<16x6xf32, #tpu.memory_space<vmem>>, vector<16x6xf32>,
    return
  }
  func.func @transform_0(%arg0: i32) -> (i32, i32) {
    %c0_i32 = arith.constant 0 : i32
    %c0_i32_0 = arith.constant 0 : i32
    return %arg0, %c0_i32 : i32, i32
  }
  func.func @transform_1(%arg0: i32) -> (i32, i32) {
    %c0_i32 = arith.constant 0 : i32
    %c0_i32_0 = arith.constant 0 : i32
    %c0_i32_1 = arith.constant 0 : i32
    return %c0_i32, %c0_i32_0 : i32, i32
  }
  func.func @transform_2(%arg0: i32) -> (i32, i32) {
    %c0_i32 = arith.constant 0 : i32
    %c0_i32_0 = arith.constant 0 : i32
    %c0_i32_1 = arith.constant 0 : i32
    return %c0_i32, %c0_i32_0 : i32, i32
  }
  func.func @transform_3(%arg0: i32) -> (i32, i32) {
    %c0_i32 = arith.constant 0 : i32
    %c0_i32_0 = arith.constant 0 : i32
    return %arg0, %c0_i32 : i32, i32
  }
}

</mosaic_0001>

<llo_original>
// kernel: tpu_custom_call.1
$region0: #{tpu_custom_call.1}
  #allocation0 [shape = 'u32[]', space=smem, size = 0x4, offset = 0x4, fixed_abs, tag = 'smem constant byte address 0x4 - core index']
  #allocation1 [shape = 'u32[144,128]{1,0:T(1,128)}', space=vmem, size = 0x12000, scoped, tag = 'internal scratch']
  %s0 = inlined_call_operand.vmem [shape: f32[16,32], index: 0, kind: input, shape index: {}]
  %s1 = inlined_call_operand.vmem [shape: f32[32,6], index: 1, kind: input, shape index: {}]
  %s2 = inlined_call_operand.vmem [shape: f32[1,6], index: 2, kind: input, shape index: {}]
  %s3 = inlined_call_operand.vmem [shape: f32[16,6], index: 3, kind: output, shape index: {}]
  %s4 = sld [smem:[#allocation0]]
  $region22: #{tpu_custom_call.1} parent=0
    _
  %s6 = ssub.s32 1, %s4
  %s7 = scalar_select 0, %s6, %s4
  // Predicated region
  $region2: #{tpu_custom_call.1} parent=0 // pred_check
    _
  $region3: #{tpu_custom_call.1} parent=0 // pred_check_branch
    %9 = sbr.rel (0) target = $region5
  $region4: #{tpu_custom_call.1} parent=0 // pred_region
    _
  $region5: #{tpu_custom_call.1} parent=0 // pred_fallthru
    _
  // Predicated region
  $region6: #{tpu_custom_call.1} parent=0 // pred_check
    _
  $region7: #{tpu_custom_call.1} parent=0 // pred_check_branch
    %11 = sbr.rel (0) target = $region9
  $region8: #{tpu_custom_call.1} parent=0 // pred_region
    _
  $region9: #{tpu_custom_call.1} parent=0 // pred_fallthru
    _
  // Predicated region
  $region10: #{tpu_custom_call.1} parent=0 // pred_check
    _
  $region11: #{tpu_custom_call.1} parent=0 // pred_check_branch
    %13 = sbr.rel (0) target = $region13
  $region12: #{tpu_custom_call.1} parent=0 // pred_region
    _
  $region13: #{tpu_custom_call.1} parent=0 // pred_fallthru
    _
  %v14 = vld [vmem:[%s0] sm:$0xff]
  %v15 = vld [vmem:[%s0 + $0x8] sm:$0xff]
  %v16 = vld [vmem:[%s1] sm:$0xff]
  %v17 = vld [vmem:[%s1 + $0x8] sm:$0xff]
  %v18 = vld [vmem:[%s1 + $0x10] sm:$0xff]
  %v19 = vld [vmem:[%s1 + $0x18] sm:$0xff]
  %v20 = vld [vmem:[%s2] sm:$0x1]
  %v22 = vlaneseq
  %v23 = vshrl.u32 %v22, 7
  %v24 = vsub.s32 0, %v23
  %v25 = vrot.slane %v20, %v24
  %vm27 = vcmask 261120
  %v29 = vsel %vm27, %v14, 0
  %v32 = vsel %vm27, %v15, 0
  %34 = vmatprep.subr.mxu0 0.0
  %35 = vmatpush1.msra.mxu0 %v16
  %36 = vmatprep.subr.mxu0 0.0
  %37 = vmatpush1.msra.mxu0 %v17
  %38 = vmatprep.subr.mxu0 0.0
  %39 = vmatpush1.msra.mxu0 %v18
  %40 = vmatprep.subr.mxu0 0.0
  %41 = vmatpush1.msra.mxu0 %v19
  %42 = vmatprep.subr.mxu0 0.0
  %43 = vmatpush1.msra.mxu0 0.0
  %44 = vmatprep.subr.mxu0 0.0
  %45 = vmatpush1.msra.mxu0 0.0
  %46 = vmatprep.subr.mxu0 0.0
  %47 = vmatpush1.msra.mxu0 0.0
  %48 = vmatprep.subr.mxu0 0.0
  %49 = vmatpush1.msra.mxu0 0.0
  %50 = vmatprep.subr.mxu0 0.0
  %51 = vmatpush1.msra.mxu0 0.0
  %52 = vmatprep.subr.mxu0 0.0
  %53 = vmatpush1.msra.mxu0 0.0
  %54 = vmatprep.subr.mxu0 0.0
  %55 = vmatpush1.msra.mxu0 0.0
  %56 = vmatprep.subr.mxu0 0.0
  %57 = vmatpush1.msra.mxu0 0.0
  %58 = vmatprep.subr.mxu0 0.0
  %59 = vmatpush1.msra.mxu0 0.0
  %60 = vmatprep.subr.mxu0 0.0
  %61 = vmatpush1.msra.mxu0 0.0
  %62 = vmatprep.subr.mxu0 0.0
  %63 = vmatpush1.msra.mxu0 0.0
  %64 = vmatprep.subr.mxu0 0.0
  %65 = vmatpush1.msra.mxu0 0.0
  %66 = vmatprep.subr.mxu0 0.0
  %67 = vmatpush1.msra.mxu0 0.0
  %68 = vmatprep.subr.mxu0 0.0
  %69 = vmatpush1.msra.mxu0 0.0
  %70 = vmatprep.subr.mxu0 0.0
  %71 = vmatpush1.msra.mxu0 0.0
  %72 = vmatprep.subr.mxu0 0.0
  %73 = vmatpush1.msra.mxu0 0.0
  %74 = vmatprep.subr.mxu0 0.0
  %75 = vmatpush1.msra.mxu0 0.0
  %76 = vmatprep.subr.mxu0 0.0
  %77 = vmatpush1.msra.mxu0 0.0
  %78 = vmatprep.subr.mxu0 0.0
  %79 = vmatpush1.msra.mxu0 0.0
  %80 = vmatprep.subr.mxu0 0.0
  %81 = vmatpush1.msra.mxu0 0.0
  %82 = vmatprep.subr.mxu0 0.0
  %83 = vmatpush1.msra.mxu0 0.0
  %84 = vmatprep.subr.mxu0 0.0
  %85 = vmatpush1.msra.mxu0 0.0
  %86 = vmatprep.subr.mxu0 0.0
  %87 = vmatpush1.msra.mxu0 0.0
  %88 = vmatprep.subr.mxu0 0.0
  %89 = vmatpush1.msra.mxu0 0.0
  %90 = vmatprep.subr.mxu0 0.0
  %91 = vmatpush1.msra.mxu0 0.0
  %92 = vmatprep.subr.mxu0 0.0
  %93 = vmatpush1.msra.mxu0 0.0
  %94 = vmatprep.subr.mxu0 0.0
  %95 = vmatpush1.msra.mxu0 0.0
  %96 = vmatprep.subr.mxu0 0.0
  %97 = vmatpush1.msra.mxu0 0.0
  %98 = vmatprep.mubr.f32.mxu0 0.0
  %99 = vmatmul.mubr.f32.gmra.mrb[0].mxu0 %v29
  %v100 = vpop.f32.mrb[0].mxu0
  %v101 = vadd.f32 %v25, %v100
  %v102 = vpop.f32.mrb[0].mxu0
  %103 = vmatprep.mubr.f32.mxu0 0.0
  %104 = vmatmul.mubr.f32.gmra.mrb[0].mxu0 %v32
  %v105 = vpop.f32.mrb[0].mxu0
  %v106 = vadd.f32 %v25, %v105
  %v107 = vpop.f32.mrb[0].mxu0
  %108 = vdwg.mxu0
  %vm109 = vcmask 48128
  %v110 = vsel %vm109, %v101, -inf
  %111 = vmax.xlane.f32.xlu0 %v110
  %v112 = vpop.xlane.xlu0 %111
  %v113 = vsel %vm109, %v106, -inf
  %114 = vmax.xlane.f32.xlu0 %v113
  %v115 = vpop.xlane.xlu0 %114
  %v116 = vsub.f32 %v101, %v112
  %v117 = vsub.f32 %v106, %v115
  %v118 = vmul.f32 %v116, 1.442695
  %v119 = vpow.pop %v118
  %v120 = vmul.f32 %v117, 1.442695
  %v121 = vpow.pop %v120
  %v122 = vsel %vm109, %v119, 0.0
  %123 = vadd.xlane.f32.xlu0 %v122
  %v124 = vpop.xlane.xlu0 %123
  %v125 = vsel %vm109, %v121, 0.0
  %126 = vadd.xlane.f32.xlu0 %v125
  %v127 = vpop.xlane.xlu0 %126
  %v128 = vrcp.pop %v124
  %v129 = vmul.f32 %v119, %v128
  %v130 = vrcp.pop %v127
  %v131 = vmul.f32 %v121, %v130
  %132 = vst.msk [vmem:[%s3] sm:$0xff] %vm109, %v129
  %133 = vst.msk [vmem:[%s3 + $0x8] sm:$0xff] %vm109, %v131
  // Predicated region
  $region14: #{tpu_custom_call.1} parent=0 // pred_check
    _
  $region15: #{tpu_custom_call.1} parent=0 // pred_check_branch
    %135 = sbr.rel (0) target = $region17
  $region16: #{tpu_custom_call.1} parent=0 // pred_region
    _
  $region17: #{tpu_custom_call.1} parent=0 // pred_fallthru
    _
  // Predicated region
  $region18: #{tpu_custom_call.1} parent=0 // pred_check
    _
  $region19: #{tpu_custom_call.1} parent=0 // pred_check_branch
    %137 = sbr.rel (0) target = $region21
  $region20: #{tpu_custom_call.1} parent=0 // pred_region
    _
  $region21: #{tpu_custom_call.1} parent=0 // pred_fallthru
    _

</llo_original>
